<compile_context>
chip_gen: v7x
topology: tpu7x:2x2x1
jax: 0.10.0
libtpu: 0.0.40
codegen_flags: <defaults>
</compile_context>

<pallas_src>
import math

import jax
import jax.numpy as jnp
from jax.experimental import pallas as pl
from jax.experimental.pallas import tpu as pltpu

_LANE = 128


def _round_up(x, m):
    return ((x + m - 1) // m) * m


def actor_forward_kernel(x_ref, w1_ref, b1_ref, w2_ref, b2_ref,
                         w3_ref, b3_ref, o_ref):
    """Fused MLP tile, batch-in-lane: 3 MXU matmuls + f32 bias/ReLU/tanh.

    Shapes inside one grid step (TB = batch tile, lane dim):
      x:(S,TB)  w1:(H,S) b1:(H,1)  w2:(H,H) b2:(H,1)  w3:(A,H) b3:(A,1)
      o:(A,TB)
    """
    x = x_ref[...]                                            # (S, TB)

    # Layer 1: (H,S) @ (S,TB) + (H,1) -> ReLU   (f32 accumulate + elementwise)
    h1 = jnp.dot(w1_ref[...], x, preferred_element_type=jnp.float32) + b1_ref[...]
    h1 = jnp.maximum(h1, 0.0)

    # Layer 2: (H,H) @ (H,TB) + (H,1) -> ReLU
    h2 = jnp.dot(w2_ref[...], h1.astype(w2_ref.dtype),
                 preferred_element_type=jnp.float32) + b2_ref[...]
    h2 = jnp.maximum(h2, 0.0)

    # Layer 3 (means half only): (A,H) @ (H,TB) + (A,1) -> tanh
    means = jnp.dot(w3_ref[...], h2.astype(w3_ref.dtype),
                    preferred_element_type=jnp.float32) + b3_ref[...]
    o_ref[...] = jnp.tanh(means).astype(o_ref.dtype)


def prepare_actor_params(params, *, use_bf16=True):
    """One-time parameter prep (hoisted out of the per-step hot path).

    Takes PyTorch-layout params (w:(out,in), b:(out,)), slices off the unused
    log_std half of layer 3, casts weights to the MXU dtype and biases to f32
    column vectors for the batch-in-lane kernel.
    """
    w1, b1, w2, b2, w3, b3 = params
    a = w3.shape[0] // 2
    mxu = jnp.bfloat16 if use_bf16 else jnp.float32
    return (
        w1.astype(mxu), b1.astype(jnp.float32).reshape(-1, 1),
        w2.astype(mxu), b2.astype(jnp.float32).reshape(-1, 1),
        w3[:a].astype(mxu), b3[:a].astype(jnp.float32).reshape(-1, 1),
    )


def actor_forward(states, prepared_params, *, block_batch=None):
    """Pallas wrapper: batch-in-lane layout, batch-tiled grid, weights resident."""
    w1, b1, w2, b2, w3m, b3m = prepared_params
    B, S = states.shape
    H = w1.shape[0]
    A = w3m.shape[0]
    mxu_dtype = w1.dtype

    # Batch tile: big (amortize per-step overhead), lane-aligned (128), and on
    # v7x capped so the grid has at least 2 balanced "parallel" steps.
    if block_batch is None:
        block_batch = 2048
    tb = min(_round_up(block_batch, _LANE), _round_up(B, _LANE))
    if B > _LANE:
        tb = min(tb, _round_up(pl.cdiv(B, 2), _LANE))
    b_pad = _round_up(B, tb)
    grid = (b_pad // tb,)

    # Batch-in-lane: (B,S) -> (S,B), zero-pad batch to a tile multiple so tail
    # tiles never compute on garbage (output tail is sliced off below).
    x_t = states.T.astype(mxu_dtype)
    if b_pad != B:
        x_t = jnp.pad(x_t, ((0, 0), (0, b_pad - B)))

    itemsize = jnp.dtype(mxu_dtype).itemsize
    flops = 2 * b_pad * (S * H + H * H + H * A)
    bytes_accessed = (
        b_pad * S * itemsize                      # states^T
        + (S * H + H * H + H * A) * itemsize      # weights (resident)
        + (2 * H + A) * 4                         # biases (f32)
        + b_pad * A * jnp.dtype(states.dtype).itemsize  # output
    )

    out_t = pl.pallas_call(
        actor_forward_kernel,
        out_shape=jax.ShapeDtypeStruct((A, b_pad), states.dtype),
        grid=grid,
        in_specs=[
            pl.BlockSpec((S, tb), lambda i: (0, i)),   # states^T: streamed per tile
            pl.BlockSpec((H, S), lambda i: (0, 0)),    # w1: resident
            pl.BlockSpec((H, 1), lambda i: (0, 0)),    # b1
            pl.BlockSpec((H, H), lambda i: (0, 0)),    # w2
            pl.BlockSpec((H, 1), lambda i: (0, 0)),    # b2
            pl.BlockSpec((A, H), lambda i: (0, 0)),    # w3 (means half)
            pl.BlockSpec((A, 1), lambda i: (0, 0)),    # b3 (means half)
        ],
        out_specs=pl.BlockSpec((A, tb), lambda i: (0, i)),   # lane-dense output
        compiler_params=pltpu.CompilerParams(
            dimension_semantics=("parallel",),      # megacore-shard batch on v7x
        ),
        cost_estimate=pl.CostEstimate(
            flops=flops,
            transcendentals=b_pad * A,              # tanh
            bytes_accessed=bytes_accessed,
        ),
    )(x_t, w1, b1, w2, b2, w3m, b3m)

    return out_t[:, :B].T                            # back to (B, A)


def init_params(key, state_size, action_size, hidden_size=64):
    """PyTorch-style nn.Linear init (uniform +-1/sqrt(fan_in)), (out,in) layout."""
    def linear(key, fan_in, fan_out):
        kw, kb = jax.random.split(key)
        bound = 1.0 / math.sqrt(fan_in)
        w = jax.random.uniform(kw, (fan_out, fan_in), jnp.float32, -bound, bound)
        b = jax.random.uniform(kb, (fan_out,), jnp.float32, -bound, bound)
        return w, b

    k1, k2, k3 = jax.random.split(key, 3)
    w1, b1 = linear(k1, state_size, hidden_size)
    w2, b2 = linear(k2, hidden_size, hidden_size)
    w3, b3 = linear(k3, hidden_size, 2 * action_size)
    return w1, b1, w2, b2, w3, b3


def actor_forward_ref(states, params, *, use_bf16=False):
    """Pure-JAX reference of ActorNetwork.forward (same dtype policy options)."""
    w1, b1, w2, b2, w3, b3 = params
    A = w3.shape[0] // 2
    dt = jnp.bfloat16 if use_bf16 else states.dtype
    x = states.astype(dt)
    h = jnp.maximum(
        jnp.dot(x, w1.T.astype(dt), preferred_element_type=jnp.float32) + b1, 0.0)
    h = jnp.maximum(
        jnp.dot(h.astype(dt), w2.T.astype(dt), preferred_element_type=jnp.float32) + b2, 0.0)
    out = (jnp.dot(h.astype(dt), w3[:A].T.astype(dt),
                   preferred_element_type=jnp.float32) + b3[:A])
    return jnp.tanh(out)


# TODO(synk): ActorNetwork.sample() (reparameterize / calculate_log_pi) is a
# stochastic sampling path outside forward(); not implemented here.


if __name__ == "__main__":
    state_size, action_size, hidden_size = 16, 8, 64

    key = jax.random.PRNGKey(0)
    k_params, k_states = jax.random.split(key)
    params = init_params(k_params, state_size, action_size, hidden_size)

    # --- Check 1: f32 path, single tile (B < 128), tight tolerance ---
    prepared_f32 = prepare_actor_params(params, use_bf16=False)
    states_small = jax.random.normal(k_states, (8, state_size), jnp.float32)
    out_f32 = jax.block_until_ready(actor_forward(states_small, prepared_f32))
    ref_f32 = actor_forward_ref(states_small, params, use_bf16=False)
    assert out_f32.shape == (8, action_size)
    assert jnp.allclose(out_f32, ref_f32, atol=2e-5, rtol=2e-5)

    # --- Check 2: bf16 MXU path, multi-step grid + padded tail (B=300) ---
    prepared_bf16 = prepare_actor_params(params, use_bf16=True)
    states_big = jax.random.normal(k_states, (300, state_size), jnp.float32)
    out_bf16 = jax.block_until_ready(actor_forward(states_big, prepared_bf16))
    ref_bf16 = actor_forward_ref(states_big, params, use_bf16=True)
    assert out_bf16.shape == (300, action_size)
    assert jnp.allclose(out_bf16, ref_bf16, atol=2e-3, rtol=2e-3)
    # bf16-fed MXU still tracks the pure-f32 forward closely.
    assert jnp.allclose(out_bf16, actor_forward_ref(states_big, params),
                        atol=5e-2, rtol=5e-2)

    # --- Check 3: explicit small tile -> 3 grid steps, same answer ---
    out_tiled = jax.block_until_ready(
        actor_forward(states_big, prepared_bf16, block_batch=128))
    assert jnp.allclose(out_tiled, out_bf16, atol=1e-5, rtol=1e-5)

    print("KERNEL_OK")
</pallas_src>

<mosaic_0001>
module attributes {stable_mosaic.version = 11 : i64} {
  func.func @actor_forward_kernel(%arg0: i32, %arg1: memref<16x128xf32, #tpu.memory_space<vmem>>, %arg2: memref<64x16xf32, #tpu.memory_space<vmem>>, %arg3: memref<64x1xf32, #tpu.memory_space<vmem>>, %arg4: memref<64x64xf32, #tpu.memory_space<vmem>>, %arg5: memref<64x1xf32, #tpu.memory_space<vmem>>, %arg6: memref<8x64xf32, #tpu.memory_space<vmem>>, %arg7: memref<8x1xf32, #tpu.memory_space<vmem>>, %arg8: memref<8x128xf32, #tpu.memory_space<vmem>>) attributes {dimension_semantics = [#tpu.dimension_semantics<parallel>], iteration_bounds = array<i64: 1>, scalar_prefetch = 0 : i64, scratch_operands = 0 : i64, tpu.core_type = #tpu.core_type<tc>, window_params = [{transform_indices = @transform_0, window_bounds = array<i64: 16, 128>}, {pipeline_mode = #tpu.pipeline_mode<synchronous>, transform_indices = @transform_1, window_bounds = array<i64: 64, 16>}, {pipeline_mode = #tpu.pipeline_mode<synchronous>, transform_indices = @transform_2, window_bounds = array<i64: 64, 1>}, {pipeline_mode = #tpu.pipeline_mode<synchronous>, transform_indices = @transform_3, window_bounds = array<i64: 64, 64>}, {pipeline_mode = #tpu.pipeline_mode<synchronous>, transform_indices = @transform_4, window_bounds = array<i64: 64, 1>}, {pipeline_mode = #tpu.pipeline_mode<synchronous>, transform_indices = @transform_5, window_bounds = array<i64: 8, 64>}, {pipeline_mode = #tpu.pipeline_mode<synchronous>, transform_indices = @transform_6, window_bounds = array<i64: 8, 1>}, {transform_indices = @transform_7, window_bounds = array<i64: 8, 128>}]} {
    %c0 = arith.constant 0 : index
    %c0_0 = arith.constant 0 : index
    %0 = vector.load %arg1[%c0, %c0_0] : memref<16x128xf32, #tpu.memory_space<vmem>>, vector<16x128xf32>
    %c0_1 = arith.constant 0 : index
    %c0_2 = arith.constant 0 : index
    %1 = vector.load %arg2[%c0_1, %c0_2] : memref<64x16xf32, #tpu.memory_space<vmem>>, vector<64x16xf32>
    %cst = arith.constant dense<0.000000e+00> : vector<64x128xf32>
    %2 = tpu.matmul %1, %0, %cst {dimension_numbers = #tpu.dot_dimension_numbers<[1], [0], [0], [1], [0, 0, 1, 1], [], []>} : vector<64x16xf32>, vector<16x128xf32>, vector<64x128xf32> -> vector<64x128xf32>
    %c0_3 = arith.constant 0 : index
    %c0_4 = arith.constant 0 : index
    %3 = vector.load %arg3[%c0_3, %c0_4] : memref<64x1xf32, #tpu.memory_space<vmem>>, vector<64x1xf32>
    %4 = vector.broadcast %3 : vector<64x1xf32> to vector<64x128xf32>
    %5 = arith.addf %2, %4 : vector<64x128xf32>
    %cst_5 = arith.constant 0.000000e+00 : f32
    %6 = vector.broadcast %cst_5 : f32 to vector<64x128xf32>
    %7 = arith.maximumf %5, %6 : vector<64x128xf32>
    %c0_6 = arith.constant 0 : index
    %c0_7 = arith.constant 0 : index
    %8 = vector.load %arg4[%c0_6, %c0_7] : memref<64x64xf32, #tpu.memory_space<vmem>>, vector<64x64xf32>
    %cst_8 = arith.constant dense<0.000000e+00> : vector<64x128xf32>
    %9 = tpu.matmul %8, %7, %cst_8 {dimension_numbers = #tpu.dot_dimension_numbers<[1], [0], [0], [1], [0, 0, 1, 1], [], []>} : vector<64x64xf32>, vector<64x128xf32>, vector<64x128xf32> -> vector<64x128xf32>
    %c0_9 = arith.constant 0 : index
    %c0_10 = arith.constant 0 : index
    %10 = vector.load %arg5[%c0_9, %c0_10] : memref<64x1xf32, #tpu.memory_space<vmem>>, vector<64x1xf32>
    %11 = vector.broadcast %10 : vector<64x1xf32> to vector<64x128xf32>
    %12 = arith.addf %9, %11 : vector<64x128xf32>
    %cst_11 = arith.constant 0.000000e+00 : f32
    %13 = vector.broadcast %cst_11 : f32 to vector<64x128xf32>
    %14 = arith.maximumf %12, %13 : vector<64x128xf32>
    %c0_12 = arith.constant 0 : index
    %c0_13 = arith.constant 0 : index
    %15 = vector.load %arg6[%c0_12, %c0_13] : memref<8x64xf32, #tpu.memory_space<vmem>>, vector<8x64xf32>
    %cst_14 = arith.constant dense<0.000000e+00> : vector<8x128xf32>
    %16 = tpu.matmul %15, %14, %cst_14 {dimension_numbers = #tpu.dot_dimension_numbers<[1], [0], [0], [1], [0, 0, 1, 1], [], []>} : vector<8x64xf32>, vector<64x128xf32>, vector<8x128xf32> -> vector<8x128xf32>
    %c0_15 = arith.constant 0 : index
    %c0_16 = arith.constant 0 : index
    %17 = vector.load %arg7[%c0_15, %c0_16] : memref<8x1xf32, #tpu.memory_space<vmem>>, vector<8x1xf32>
    %18 = vector.broadcast %17 : vector<8x1xf32> to vector<8x128xf32>
    %19 = arith.addf %16, %18 : vector<8x128xf32>
    %20 = math.tanh %19 : vector<8x128xf32>
    %c0_17 = arith.constant 0 : index
    %c0_18 = arith.constant 0 : index
    %21 = vector.load %arg8[%c0_17, %c0_18] : memref<8x128xf32, #tpu.memory_space<vmem>>, vector<8x128xf32>
    tpu.vector_store %arg8[%c0_17, %c0_18], %20 {strides = array<i32>} : memref<8x128xf32, #tpu.memory_space<vmem>>, vector<8x128xf32>,
    return
  }
  func.func @transform_0(%arg0: i32) -> (i32, i32) {
    %c0_i32 = arith.constant 0 : i32
    %c0_i32_0 = arith.constant 0 : i32
    return %c0_i32, %arg0 : i32, i32
  }
  func.func @transform_1(%arg0: i32) -> (i32, i32) {
    %c0_i32 = arith.constant 0 : i32
    %c0_i32_0 = arith.constant 0 : i32
    %c0_i32_1 = arith.constant 0 : i32
    return %c0_i32, %c0_i32_0 : i32, i32
  }
  func.func @transform_2(%arg0: i32) -> (i32, i32) {
    %c0_i32 = arith.constant 0 : i32
    %c0_i32_0 = arith.constant 0 : i32
    %c0_i32_1 = arith.constant 0 : i32
    return %c0_i32, %c0_i32_0 : i32, i32
  }
  func.func @transform_3(%arg0: i32) -> (i32, i32) {
    %c0_i32 = arith.constant 0 : i32
    %c0_i32_0 = arith.constant 0 : i32
    %c0_i32_1 = arith.constant 0 : i32
    return %c0_i32, %c0_i32_0 : i32, i32
  }
  func.func @transform_4(%arg0: i32) -> (i32, i32) {
    %c0_i32 = arith.constant 0 : i32
    %c0_i32_0 = arith.constant 0 : i32
    %c0_i32_1 = arith.constant 0 : i32
    return %c0_i32, %c0_i32_0 : i32, i32
  }
  func.func @transform_5(%arg0: i32) -> (i32, i32) {
    %c0_i32 = arith.constant 0 : i32
    %c0_i32_0 = arith.constant 0 : i32
    %c0_i32_1 = arith.constant 0 : i32
    return %c0_i32, %c0_i32_0 : i32, i32
  }
  func.func @transform_6(%arg0: i32) -> (i32, i32) {
    %c0_i32 = arith.constant 0 : i32
    %c0_i32_0 = arith.constant 0 : i32
    %c0_i32_1 = arith.constant 0 : i32
    return %c0_i32, %c0_i32_0 : i32, i32
  }
  func.func @transform_7(%arg0: i32) -> (i32, i32) {
    %c0_i32 = arith.constant 0 : i32
    %c0_i32_0 = arith.constant 0 : i32
    return %c0_i32, %arg0 : i32, i32
  }
}

</mosaic_0001>

<llo_original>
// kernel: tpu_custom_call.1
$region0: #{tpu_custom_call.1}
  #allocation0 [shape = 'u32[]', space=smem, size = 0x4, offset = 0x4, fixed_abs, tag = 'smem constant byte address 0x4 - core index']
  #allocation1 [shape = 'u32[144,128]{1,0:T(1,128)}', space=vmem, size = 0x12000, scoped, tag = 'internal scratch']
  %s0 = inlined_call_operand.vmem [shape: f32[16,128], index: 0, kind: input, shape index: {}]
  %s1 = inlined_call_operand.vmem [shape: f32[64,16], index: 1, kind: input, shape index: {}]
  %s2 = inlined_call_operand.vmem [shape: f32[64,1], index: 2, kind: input, shape index: {}]
  %s3 = inlined_call_operand.vmem [shape: f32[64,64], index: 3, kind: input, shape index: {}]
  %s4 = inlined_call_operand.vmem [shape: f32[64,1], index: 4, kind: input, shape index: {}]
  %s5 = inlined_call_operand.vmem [shape: f32[8,64], index: 5, kind: input, shape index: {}]
  %s6 = inlined_call_operand.vmem [shape: f32[8,1], index: 6, kind: input, shape index: {}]
  %s7 = inlined_call_operand.hbm [shape: f32[8,128], index: 7, kind: output, shape index: {}]
  %s8 = sld [smem:[#allocation0]]
  $region38: #{tpu_custom_call.1} parent=0
    _
  %s10 = ssub.s32 1, %s8
  %s11 = scalar_select 0, %s10, %s8
  $region1: #{tpu_custom_call.1} parent=0
    #allocation2 [shape = 'u8[4096]{0}', space=vmem, size = 0x1000, scoped, tag = 'output window, operand 0, single buffered']
    #allocation3 [shape = 's32[1]{0}', space=sflag, size = 0x4, scoped, tag = 'scoped memory for tpu_custom_call.1']
    %12 = vsyncpa [#allocation3], 0
    // Predicated region
    $region2: #{tpu_custom_call.1} parent=1 // pred_check
      _
    $region3: #{tpu_custom_call.1} parent=1 // pred_check_branch
      %14 = sbr.rel (0) target = $region5
    $region4: #{tpu_custom_call.1} parent=1 // pred_region
      _
    $region5: #{tpu_custom_call.1} parent=1 // pred_fallthru
      _
    // Predicated region
    $region6: #{tpu_custom_call.1} parent=1 // pred_check
      _
    $region7: #{tpu_custom_call.1} parent=1 // pred_check_branch
      %16 = sbr.rel (0) target = $region9
    $region8: #{tpu_custom_call.1} parent=1 // pred_region
      _
    $region9: #{tpu_custom_call.1} parent=1 // pred_fallthru
      _
    // Predicated region
    $region10: #{tpu_custom_call.1} parent=1 // pred_check
      _
    $region11: #{tpu_custom_call.1} parent=1 // pred_check_branch
      %18 = sbr.rel (0) target = $region13
    $region12: #{tpu_custom_call.1} parent=1 // pred_region
      _
    $region13: #{tpu_custom_call.1} parent=1 // pred_fallthru
      _
    // Predicated region
    $region14: #{tpu_custom_call.1} parent=1 // pred_check
      _
    $region15: #{tpu_custom_call.1} parent=1 // pred_check_branch
      %20 = sbr.rel (0) target = $region17
    $region16: #{tpu_custom_call.1} parent=1 // pred_region
      _
    $region17: #{tpu_custom_call.1} parent=1 // pred_fallthru
      _
    // Predicated region
    $region18: #{tpu_custom_call.1} parent=1 // pred_check
      _
    $region19: #{tpu_custom_call.1} parent=1 // pred_check_branch
      %22 = sbr.rel (0) target = $region21
    $region20: #{tpu_custom_call.1} parent=1 // pred_region
      _
    $region21: #{tpu_custom_call.1} parent=1 // pred_fallthru
      _
    // Predicated region
    $region22: #{tpu_custom_call.1} parent=1 // pred_check
      _
    $region23: #{tpu_custom_call.1} parent=1 // pred_check_branch
      %24 = sbr.rel (0) target = $region25
    $region24: #{tpu_custom_call.1} parent=1 // pred_region
      _
    $region25: #{tpu_custom_call.1} parent=1 // pred_fallthru
      _
    // Predicated region
    $region26: #{tpu_custom_call.1} parent=1 // pred_check
      _
    $region27: #{tpu_custom_call.1} parent=1 // pred_check_branch
      %26 = sbr.rel (0) target = $region29
    $region28: #{tpu_custom_call.1} parent=1 // pred_region
      _
    $region29: #{tpu_custom_call.1} parent=1 // pred_fallthru
      _
    %v27 = vld [vmem:[%s0] sm:$0xff]
    %v28 = vld [vmem:[%s0 + $0x8] sm:$0xff]
    %v29 = vld [vmem:[%s1] sm:$0xff]
    %v30 = vld [vmem:[%s1 + $0x8] sm:$0xff]
    %v31 = vld [vmem:[%s1 + $0x10] sm:$0xff]
    %v32 = vld [vmem:[%s1 + $0x18] sm:$0xff]
    %v33 = vld [vmem:[%s1 + $0x20] sm:$0xff]
    %v34 = vld [vmem:[%s1 + $0x28] sm:$0xff]
    %v35 = vld [vmem:[%s1 + $0x30] sm:$0xff]
    %v36 = vld [vmem:[%s1 + $0x38] sm:$0xff]
    %v37 = vld [vmem:[%s2] sm:$0xff]
    %v38 = vld [vmem:[%s2 + $0x8] sm:$0xff]
    %v39 = vld [vmem:[%s2 + $0x10] sm:$0xff]
    %v40 = vld [vmem:[%s2 + $0x18] sm:$0xff]
    %v41 = vld [vmem:[%s2 + $0x20] sm:$0xff]
    %v42 = vld [vmem:[%s2 + $0x28] sm:$0xff]
    %v43 = vld [vmem:[%s2 + $0x30] sm:$0xff]
    %v44 = vld [vmem:[%s2 + $0x38] sm:$0xff]
    %46 = vset.pattern.permute.xlu0 0
    %47 = vperm.xlu0 %46, %v37
    %v48 = vpop.permute.xlu0 %47
    %51 = vset.pattern.permute.xlu0 0
    %52 = vperm.xlu0 %51, %v38
    %v53 = vpop.permute.xlu0 %52
    %56 = vset.pattern.permute.xlu0 0
    %57 = vperm.xlu0 %56, %v39
    %v58 = vpop.permute.xlu0 %57
    %61 = vset.pattern.permute.xlu0 0
    %62 = vperm.xlu0 %61, %v40
    %v63 = vpop.permute.xlu0 %62
    %66 = vset.pattern.permute.xlu0 0
    %67 = vperm.xlu0 %66, %v41
    %v68 = vpop.permute.xlu0 %67
    %71 = vset.pattern.permute.xlu0 0
    %72 = vperm.xlu0 %71, %v42
    %v73 = vpop.permute.xlu0 %72
    %76 = vset.pattern.permute.xlu0 0
    %77 = vperm.xlu0 %76, %v43
    %v78 = vpop.permute.xlu0 %77
    %81 = vset.pattern.permute.xlu0 0
    %82 = vperm.xlu0 %81, %v44
    %v83 = vpop.permute.xlu0 %82
    %vm85 = vcmask 130048
    %v87 = vsel %vm85, %v29, 0
    %v90 = vsel %vm85, %v30, 0
    %v93 = vsel %vm85, %v31, 0
    %v96 = vsel %vm85, %v32, 0
    %v99 = vsel %vm85, %v33, 0
    %v102 = vsel %vm85, %v34, 0
    %v105 = vsel %vm85, %v35, 0
    %v108 = vsel %vm85, %v36, 0
    %110 = vmatprep.subr.mxu0 0.0
    %111 = vmatpush1.msra.mxu0 %v27
    %112 = vmatprep.subr.mxu0 0.0
    %113 = vmatpush1.msra.mxu0 %v28
    %114 = vmatprep.subr.mxu0 0.0
    %115 = vmatpush1.msra.mxu0 0.0
    %116 = vmatprep.subr.mxu0 0.0
    %117 = vmatpush1.msra.mxu0 0.0
    %118 = vmatprep.subr.mxu0 0.0
    %119 = vmatpush1.msra.mxu0 0.0
    %120 = vmatprep.subr.mxu0 0.0
    %121 = vmatpush1.msra.mxu0 0.0
    %122 = vmatprep.subr.mxu0 0.0
    %123 = vmatpush1.msra.mxu0 0.0
    %124 = vmatprep.subr.mxu0 0.0
    %125 = vmatpush1.msra.mxu0 0.0
    %126 = vmatprep.subr.mxu0 0.0
    %127 = vmatpush1.msra.mxu0 0.0
    %128 = vmatprep.subr.mxu0 0.0
    %129 = vmatpush1.msra.mxu0 0.0
    %130 = vmatprep.subr.mxu0 0.0
    %131 = vmatpush1.msra.mxu0 0.0
    %132 = vmatprep.subr.mxu0 0.0
    %133 = vmatpush1.msra.mxu0 0.0
    %134 = vmatprep.subr.mxu0 0.0
    %135 = vmatpush1.msra.mxu0 0.0
    %136 = vmatprep.subr.mxu0 0.0
    %137 = vmatpush1.msra.mxu0 0.0
    %138 = vmatprep.subr.mxu0 0.0
    %139 = vmatpush1.msra.mxu0 0.0
    %140 = vmatprep.subr.mxu0 0.0
    %141 = vmatpush1.msra.mxu0 0.0
    %142 = vmatprep.subr.mxu0 0.0
    %143 = vmatpush1.msra.mxu0 0.0
    %144 = vmatprep.subr.mxu0 0.0
    %145 = vmatpush1.msra.mxu0 0.0
    %146 = vmatprep.subr.mxu0 0.0
    %147 = vmatpush1.msra.mxu0 0.0
    %148 = vmatprep.subr.mxu0 0.0
    %149 = vmatpush1.msra.mxu0 0.0
    %150 = vmatprep.subr.mxu0 0.0
    %151 = vmatpush1.msra.mxu0 0.0
    %152 = vmatprep.subr.mxu0 0.0
    %153 = vmatpush1.msra.mxu0 0.0
    %154 = vmatprep.subr.mxu0 0.0
    %155 = vmatpush1.msra.mxu0 0.0
    %156 = vmatprep.subr.mxu0 0.0
    %157 = vmatpush1.msra.mxu0 0.0
    %158 = vmatprep.subr.mxu0 0.0
    %159 = vmatpush1.msra.mxu0 0.0
    %160 = vmatprep.subr.mxu0 0.0
    %161 = vmatpush1.msra.mxu0 0.0
    %162 = vmatprep.subr.mxu0 0.0
    %163 = vmatpush1.msra.mxu0 0.0
    %164 = vmatprep.subr.mxu0 0.0
    %165 = vmatpush1.msra.mxu0 0.0
    %166 = vmatprep.subr.mxu0 0.0
    %167 = vmatpush1.msra.mxu0 0.0
    %168 = vmatprep.subr.mxu0 0.0
    %169 = vmatpush1.msra.mxu0 0.0
    %170 = vmatprep.subr.mxu0 0.0
    %171 = vmatpush1.msra.mxu0 0.0
    %172 = vmatprep.subr.mxu0 0.0
    %173 = vmatpush1.msra.mxu0 0.0
    %174 = vmatprep.mubr.f32.mxu0 0.0
    %175 = vmatmul.mubr.f32.gmra.mrb[0].mxu0 %v87
    %v176 = vpop.f32.mrb[0].mxu0
    %v177 = vadd.f32 %v48, %v176
    %v178 = vpop.f32.mrb[0].mxu0
    %179 = vmatprep.mubr.f32.mxu0 0.0
    %180 = vmatmul.mubr.f32.gmra.mrb[0].mxu0 %v90
    %v181 = vpop.f32.mrb[0].mxu0
    %v182 = vadd.f32 %v53, %v181
    %v183 = vpop.f32.mrb[0].mxu0
    %184 = vmatprep.mubr.f32.mxu0 0.0
    %185 = vmatmul.mubr.f32.gmra.mrb[0].mxu0 %v93
    %v186 = vpop.f32.mrb[0].mxu0
    %v187 = vadd.f32 %v58, %v186
    %v188 = vpop.f32.mrb[0].mxu0
    %189 = vmatprep.mubr.f32.mxu0 0.0
    %190 = vmatmul.mubr.f32.gmra.mrb[0].mxu0 %v96
    %v191 = vpop.f32.mrb[0].mxu0
    %v192 = vadd.f32 %v63, %v191
    %v193 = vpop.f32.mrb[0].mxu0
    %194 = vmatprep.mubr.f32.mxu0 0.0
    %195 = vmatmul.mubr.f32.gmra.mrb[0].mxu0 %v99
    %v196 = vpop.f32.mrb[0].mxu0
    %v197 = vadd.f32 %v68, %v196
    %v198 = vpop.f32.mrb[0].mxu0
    %199 = vmatprep.mubr.f32.mxu0 0.0
    %200 = vmatmul.mubr.f32.gmra.mrb[0].mxu0 %v102
    %v201 = vpop.f32.mrb[0].mxu0
    %v202 = vadd.f32 %v73, %v201
    %v203 = vpop.f32.mrb[0].mxu0
    %204 = vmatprep.mubr.f32.mxu0 0.0
    %205 = vmatmul.mubr.f32.gmra.mrb[0].mxu0 %v105
    %v206 = vpop.f32.mrb[0].mxu0
    %v207 = vadd.f32 %v78, %v206
    %v208 = vpop.f32.mrb[0].mxu0
    %209 = vmatprep.mubr.f32.mxu0 0.0
    %210 = vmatmul.mubr.f32.gmra.mrb[0].mxu0 %v108
    %v211 = vpop.f32.mrb[0].mxu0
    %v212 = vadd.f32 %v83, %v211
    %v213 = vpop.f32.mrb[0].mxu0
    %214 = vdwg.mxu0
    %v215 = vmax.f32 %v177, 0.0
    %v216 = vmax.f32 %v182, 0.0
    %v217 = vmax.f32 %v187, 0.0
    %v218 = vmax.f32 %v192, 0.0
    %v219 = vmax.f32 %v197, 0.0
    %v220 = vmax.f32 %v202, 0.0
    %v221 = vmax.f32 %v207, 0.0
    %v222 = vmax.f32 %v212, 0.0
    %v223 = vld [vmem:[%s3] sm:$0xff]
    %v224 = vld [vmem:[%s3 + $0x8] sm:$0xff]
    %v225 = vld [vmem:[%s3 + $0x10] sm:$0xff]
    %v226 = vld [vmem:[%s3 + $0x18] sm:$0xff]
    %v227 = vld [vmem:[%s3 + $0x20] sm:$0xff]
    %v228 = vld [vmem:[%s3 + $0x28] sm:$0xff]
    %v229 = vld [vmem:[%s3 + $0x30] sm:$0xff]
    %v230 = vld [vmem:[%s3 + $0x38] sm:$0xff]
    %v231 = vld [vmem:[%s4] sm:$0xff]
    %v232 = vld [vmem:[%s4 + $0x8] sm:$0xff]
    %v233 = vld [vmem:[%s4 + $0x10] sm:$0xff]
    %v234 = vld [vmem:[%s4 + $0x18] sm:$0xff]
    %v235 = vld [vmem:[%s4 + $0x20] sm:$0xff]
    %v236 = vld [vmem:[%s4 + $0x28] sm:$0xff]
    %v237 = vld [vmem:[%s4 + $0x30] sm:$0xff]
    %v238 = vld [vmem:[%s4 + $0x38] sm:$0xff]
    %240 = vset.pattern.permute.xlu0 0
    %241 = vperm.xlu0 %240, %v231
    %v242 = vpop.permute.xlu0 %241
    %245 = vset.pattern.permute.xlu0 0
    %246 = vperm.xlu0 %245, %v232
    %v247 = vpop.permute.xlu0 %246
    %250 = vset.pattern.permute.xlu0 0
    %251 = vperm.xlu0 %250, %v233
    %v252 = vpop.permute.xlu0 %251
    %255 = vset.pattern.permute.xlu0 0
    %256 = vperm.xlu0 %255, %v234
    %v257 = vpop.permute.xlu0 %256
    %260 = vset.pattern.permute.xlu0 0
    %261 = vperm.xlu0 %260, %v235
    %v262 = vpop.permute.xlu0 %261
    %265 = vset.pattern.permute.xlu0 0
    %266 = vperm.xlu0 %265, %v236
    %v267 = vpop.permute.xlu0 %266
    %270 = vset.pattern.permute.xlu0 0
    %271 = vperm.xlu0 %270, %v237
    %v272 = vpop.permute.xlu0 %271
    %275 = vset.pattern.permute.xlu0 0
    %276 = vperm.xlu0 %275, %v238
    %v277 = vpop.permute.xlu0 %276
    %vm279 = vcmask 523264
    %v281 = vsel %vm279, %v223, 0
    %v284 = vsel %vm279, %v224, 0
    %v287 = vsel %vm279, %v225, 0
    %v290 = vsel %vm279, %v226, 0
    %v293 = vsel %vm279, %v227, 0
    %v296 = vsel %vm279, %v228, 0
    %v299 = vsel %vm279, %v229, 0
    %v302 = vsel %vm279, %v230, 0
    %304 = vmatprep.subr.mxu0 0.0
    %305 = vmatpush1.msra.mxu0 %v215
    %306 = vmatprep.subr.mxu0 0.0
    %307 = vmatpush1.msra.mxu0 %v216
    %308 = vmatprep.subr.mxu0 0.0
    %309 = vmatpush1.msra.mxu0 %v217
    %310 = vmatprep.subr.mxu0 0.0
    %311 = vmatpush1.msra.mxu0 %v218
    %312 = vmatprep.subr.mxu0 0.0
    %313 = vmatpush1.msra.mxu0 %v219
    %314 = vmatprep.subr.mxu0 0.0
    %315 = vmatpush1.msra.mxu0 %v220
    %316 = vmatprep.subr.mxu0 0.0
    %317 = vmatpush1.msra.mxu0 %v221
    %318 = vmatprep.subr.mxu0 0.0
    %319 = vmatpush1.msra.mxu0 %v222
    %320 = vmatprep.subr.mxu0 0.0
    %321 = vmatpush1.msra.mxu0 0.0
    %322 = vmatprep.subr.mxu0 0.0
    %323 = vmatpush1.msra.mxu0 0.0
    %324 = vmatprep.subr.mxu0 0.0
    %325 = vmatpush1.msra.mxu0 0.0
    %326 = vmatprep.subr.mxu0 0.0
    %327 = vmatpush1.msra.mxu0 0.0
    %328 = vmatprep.subr.mxu0 0.0
    %329 = vmatpush1.msra.mxu0 0.0
    %330 = vmatprep.subr.mxu0 0.0
    %331 = vmatpush1.msra.mxu0 0.0
    %332 = vmatprep.subr.mxu0 0.0
    %333 = vmatpush1.msra.mxu0 0.0
    %334 = vmatprep.subr.mxu0 0.0
    %335 = vmatpush1.msra.mxu0 0.0
    %336 = vmatprep.subr.mxu0 0.0
    %337 = vmatpush1.msra.mxu0 0.0
    %338 = vmatprep.subr.mxu0 0.0
    %339 = vmatpush1.msra.mxu0 0.0
    %340 = vmatprep.subr.mxu0 0.0
    %341 = vmatpush1.msra.mxu0 0.0
    %342 = vmatprep.subr.mxu0 0.0
    %343 = vmatpush1.msra.mxu0 0.0
    %344 = vmatprep.subr.mxu0 0.0
    %345 = vmatpush1.msra.mxu0 0.0
    %346 = vmatprep.subr.mxu0 0.0
    %347 = vmatpush1.msra.mxu0 0.0
    %348 = vmatprep.subr.mxu0 0.0
    %349 = vmatpush1.msra.mxu0 0.0
    %350 = vmatprep.subr.mxu0 0.0
    %351 = vmatpush1.msra.mxu0 0.0
    %352 = vmatprep.subr.mxu0 0.0
    %353 = vmatpush1.msra.mxu0 0.0
    %354 = vmatprep.subr.mxu0 0.0
    %355 = vmatpush1.msra.mxu0 0.0
    %356 = vmatprep.subr.mxu0 0.0
    %357 = vmatpush1.msra.mxu0 0.0
    %358 = vmatprep.subr.mxu0 0.0
    %359 = vmatpush1.msra.mxu0 0.0
    %360 = vmatprep.subr.mxu0 0.0
    %361 = vmatpush1.msra.mxu0 0.0
    %362 = vmatprep.subr.mxu0 0.0
    %363 = vmatpush1.msra.mxu0 0.0
    %364 = vmatprep.subr.mxu0 0.0
    %365 = vmatpush1.msra.mxu0 0.0
    %366 = vmatprep.subr.mxu0 0.0
    %367 = vmatpush1.msra.mxu0 0.0
    %368 = vmatprep.mubr.f32.mxu0 0.0
    %369 = vmatmul.mubr.f32.gmra.mrb[0].mxu0 %v281
    %v370 = vpop.f32.mrb[0].mxu0
    %v371 = vadd.f32 %v242, %v370
    %v372 = vpop.f32.mrb[0].mxu0
    %373 = vmatprep.mubr.f32.mxu0 0.0
    %374 = vmatmul.mubr.f32.gmra.mrb[0].mxu0 %v284
    %v375 = vpop.f32.mrb[0].mxu0
    %v376 = vadd.f32 %v247, %v375
    %v377 = vpop.f32.mrb[0].mxu0
    %378 = vmatprep.mubr.f32.mxu0 0.0
    %379 = vmatmul.mubr.f32.gmra.mrb[0].mxu0 %v287
    %v380 = vpop.f32.mrb[0].mxu0
    %v381 = vadd.f32 %v252, %v380
    %v382 = vpop.f32.mrb[0].mxu0
    %383 = vmatprep.mubr.f32.mxu0 0.0
    %384 = vmatmul.mubr.f32.gmra.mrb[0].mxu0 %v290
    %v385 = vpop.f32.mrb[0].mxu0
    %v386 = vadd.f32 %v257, %v385
    %v387 = vpop.f32.mrb[0].mxu0
    %388 = vmatprep.mubr.f32.mxu0 0.0
    %389 = vmatmul.mubr.f32.gmra.mrb[0].mxu0 %v293
    %v390 = vpop.f32.mrb[0].mxu0
    %v391 = vadd.f32 %v262, %v390
    %v392 = vpop.f32.mrb[0].mxu0
    %393 = vmatprep.mubr.f32.mxu0 0.0
    %394 = vmatmul.mubr.f32.gmra.mrb[0].mxu0 %v296
    %v395 = vpop.f32.mrb[0].mxu0
    %v396 = vadd.f32 %v267, %v395
    %v397 = vpop.f32.mrb[0].mxu0
    %398 = vmatprep.mubr.f32.mxu0 0.0
    %399 = vmatmul.mubr.f32.gmra.mrb[0].mxu0 %v299
    %v400 = vpop.f32.mrb[0].mxu0
    %v401 = vadd.f32 %v272, %v400
    %v402 = vpop.f32.mrb[0].mxu0
    %403 = vmatprep.mubr.f32.mxu0 0.0
    %404 = vmatmul.mubr.f32.gmra.mrb[0].mxu0 %v302
    %v405 = vpop.f32.mrb[0].mxu0
    %v406 = vadd.f32 %v277, %v405
    %v407 = vpop.f32.mrb[0].mxu0
    %408 = vdwg.mxu0
    %v409 = vmax.f32 %v371, 0.0
    %v410 = vmax.f32 %v376, 0.0
    %v411 = vmax.f32 %v381, 0.0
    %v412 = vmax.f32 %v386, 0.0
    %v413 = vmax.f32 %v391, 0.0
    %v414 = vmax.f32 %v396, 0.0
    %v415 = vmax.f32 %v401, 0.0
    %v416 = vmax.f32 %v406, 0.0
    %v417 = vld [vmem:[%s5] sm:$0xff]
    %v418 = vld [vmem:[%s6] sm:$0xff]
    %420 = vset.pattern.permute.xlu0 0
    %421 = vperm.xlu0 %420, %v418
    %v422 = vpop.permute.xlu0 %421
    %v425 = vsel %vm279, %v417, 0
    %427 = vmatprep.subr.mxu0 0.0
    %428 = vmatpush1.msra.mxu0 %v409
    %429 = vmatprep.subr.mxu0 0.0
    %430 = vmatpush1.msra.mxu0 %v410
    %431 = vmatprep.subr.mxu0 0.0
    %432 = vmatpush1.msra.mxu0 %v411
    %433 = vmatprep.subr.mxu0 0.0
    %434 = vmatpush1.msra.mxu0 %v412
    %435 = vmatprep.subr.mxu0 0.0
    %436 = vmatpush1.msra.mxu0 %v413
    %437 = vmatprep.subr.mxu0 0.0
    %438 = vmatpush1.msra.mxu0 %v414
    %439 = vmatprep.subr.mxu0 0.0
    %440 = vmatpush1.msra.mxu0 %v415
    %441 = vmatprep.subr.mxu0 0.0
    %442 = vmatpush1.msra.mxu0 %v416
    %443 = vmatprep.subr.mxu0 0.0
    %444 = vmatpush1.msra.mxu0 0.0
    %445 = vmatprep.subr.mxu0 0.0
    %446 = vmatpush1.msra.mxu0 0.0
    %447 = vmatprep.subr.mxu0 0.0
    %448 = vmatpush1.msra.mxu0 0.0
    %449 = vmatprep.subr.mxu0 0.0
    %450 = vmatpush1.msra.mxu0 0.0
    %451 = vmatprep.subr.mxu0 0.0
    %452 = vmatpush1.msra.mxu0 0.0
    %453 = vmatprep.subr.mxu0 0.0
    %454 = vmatpush1.msra.mxu0 0.0
    %455 = vmatprep.subr.mxu0 0.0
    %456 = vmatpush1.msra.mxu0 0.0
    %457 = vmatprep.subr.mxu0 0.0
    %458 = vmatpush1.msra.mxu0 0.0
    %459 = vmatprep.subr.mxu0 0.0
    %460 = vmatpush1.msra.mxu0 0.0
    %461 = vmatprep.subr.mxu0 0.0
    %462 = vmatpush1.msra.mxu0 0.0
    %463 = vmatprep.subr.mxu0 0.0
    %464 = vmatpush1.msra.mxu0 0.0
    %465 = vmatprep.subr.mxu0 0.0
    %466 = vmatpush1.msra.mxu0 0.0
    %467 = vmatprep.subr.mxu0 0.0
    %468 = vmatpush1.msra.mxu0 0.0
    %469 = vmatprep.subr.mxu0 0.0
    %470 = vmatpush1.msra.mxu0 0.0
    %471 = vmatprep.subr.mxu0 0.0
    %472 = vmatpush1.msra.mxu0 0.0
    %473 = vmatprep.subr.mxu0 0.0
    %474 = vmatpush1.msra.mxu0 0.0
    %475 = vmatprep.subr.mxu0 0.0
    %476 = vmatpush1.msra.mxu0 0.0
    %477 = vmatprep.subr.mxu0 0.0
    %478 = vmatpush1.msra.mxu0 0.0
    %479 = vmatprep.subr.mxu0 0.0
    %480 = vmatpush1.msra.mxu0 0.0
    %481 = vmatprep.subr.mxu0 0.0
    %482 = vmatpush1.msra.mxu0 0.0
    %483 = vmatprep.subr.mxu0 0.0
    %484 = vmatpush1.msra.mxu0 0.0
    %485 = vmatprep.subr.mxu0 0.0
    %486 = vmatpush1.msra.mxu0 0.0
    %487 = vmatprep.subr.mxu0 0.0
    %488 = vmatpush1.msra.mxu0 0.0
    %489 = vmatprep.subr.mxu0 0.0
    %490 = vmatpush1.msra.mxu0 0.0
    %491 = vmatprep.mubr.f32.mxu0 0.0
    %492 = vmatmul.mubr.f32.gmra.mrb[0].mxu0 %v425
    %v493 = vpop.f32.mrb[0].mxu0
    %v494 = vadd.f32 %v422, %v493
    %v495 = vpop.f32.mrb[0].mxu0
    %496 = vdwg.mxu0
    %v497 = vtanh.pop %v494
    %498 = vst [vmem:[#allocation2] sm:$0xff] %v497
    // Predicated region
    $region30: #{tpu_custom_call.1} parent=1 // pred_check
      _
    $region31: #{tpu_custom_call.1} parent=1 // pred_check_branch
      %500 = sbr.rel (0) target = $region33
    $region32: #{tpu_custom_call.1} parent=1 // pred_region
      %s502 = ssub.s32 128, 128
      %503 = vsyncadd [#allocation3], %s502
      %s505 = sshll.u32 [#allocation2], 4
      %s506 = int_to_ptr.vmem [resolvable:$true] %s505
      %508 = dma.vmem_to_hbm [thread:$0]  %s506, 128, %s7, [#allocation3]
    $region33: #{tpu_custom_call.1} parent=1 // pred_fallthru
      _
    // Predicated region
    $region34: #{tpu_custom_call.1} parent=1 // pred_check
      _
    $region35: #{tpu_custom_call.1} parent=1 // pred_check_branch
      %510 = sbr.rel (0) target = $region37
    $region36: #{tpu_custom_call.1} parent=1 // pred_region
      %511 = dma.done [#allocation3], 128
    $region37: #{tpu_custom_call.1} parent=1 // pred_fallthru
      _
    %512 = vsyncpa [#allocation3], 1

</llo_original>
